<compile_context>
chip_gen: v7x
topology: tpu7x:2x2x1
jax: 0.10.0
libtpu: 0.0.40
codegen_flags: <defaults>
</compile_context>

<pallas_src>
import functools

import jax
import jax.numpy as jnp
from jax.experimental import pallas as pl
from jax.experimental.pallas import tpu as pltpu

MAX_ROWS_PER_BLOCK = 1024  # single-block limit; multiple of 8, >=128 for MXU M-dim


def dnn_rows_kernel(x_ref, w1_ref, b1_ref, w2_ref, b2_ref, o_ref):
    """fc1 -> ReLU -> fc2 -> log_softmax(dim=1) on one row tile (MXU + VPU/EUP)."""
    x = x_ref[...]  # (rows, F), f32

    # fc1 + ReLU
    h = jnp.dot(x, w1_ref[...], preferred_element_type=jnp.float32) + b1_ref[...]
    h = jnp.maximum(h, 0.0)

    # fc2
    z = jnp.dot(h, w2_ref[...], preferred_element_type=jnp.float32) + b2_ref[...]

    # log_softmax along the class axis, numerically stable
    m = jnp.max(z, axis=-1, keepdims=True)
    s = z - m
    lse = jnp.log(jnp.sum(jnp.exp(s), axis=-1, keepdims=True))
    o_ref[...] = (s - lse).astype(o_ref.dtype)


@functools.partial(jax.jit, static_argnames=("max_rows_per_block",))
def dnn_forward(x, w1_t, b1, w2_t, b2, *, max_rows_per_block=MAX_ROWS_PER_BLOCK):
    """Batched forward. Small N -> one full-row block, grid=(1,); large N ->
    1024-row tiles with weights VMEM-resident across the grid."""
    n, f = x.shape
    hdim = w1_t.shape[1]
    cdim = w2_t.shape[1]

    # Minimal sublane padding (next multiple of 8). For KarateClub batches this
    # is a no-op (272 % 8 == 0), so no extra HBM copy of x is made.
    n_pad8 = -(-n // 8) * 8
    if n_pad8 <= max_rows_per_block:
        row_tile = n_pad8          # single block covering all rows
    else:
        row_tile = max_rows_per_block

    grid = -(-n_pad8 // row_tile)
    n_pad = grid * row_tile
    if n_pad != n:
        # Zero rows are harmless (bias -> relu -> log_softmax stays finite) and
        # are sliced off below. Only happens when N doesn't fit one block.
        x = jnp.pad(x, ((0, n_pad - n), (0, 0)))

    out = pl.pallas_call(
        dnn_rows_kernel,
        out_shape=jax.ShapeDtypeStruct((n_pad, cdim), jnp.float32),
        grid=(grid,),
        in_specs=[
            pl.BlockSpec((row_tile, f), lambda i: (i, 0)),  # x: tiled over rows
            pl.BlockSpec((f, hdim), lambda i: (0, 0)),      # w1_t: VMEM-resident
            pl.BlockSpec((1, hdim), lambda i: (0, 0)),      # b1: resident
            pl.BlockSpec((hdim, cdim), lambda i: (0, 0)),   # w2_t: resident
            pl.BlockSpec((1, cdim), lambda i: (0, 0)),      # b2: resident
        ],
        out_specs=pl.BlockSpec((row_tile, cdim), lambda i: (i, 0)),
        compiler_params=pltpu.CompilerParams(
            # 2-TC split on v7x when grid > 1; no-op for the single-step case.
            dimension_semantics=("parallel",)
        ),
    )(x, w1_t, b1, w2_t, b2)
    return out[:n] if n_pad != n else out


def dnn_reference(x, w1_t, b1, w2_t, b2):
    """Pure-JAX reference (correctness oracle)."""
    h = jnp.maximum(x @ w1_t + b1, 0.0)
    z = h @ w2_t + b2
    return jax.nn.log_softmax(z, axis=-1)


@jax.jit
def dnn_identity_precompute(w1_t, b1, w2_t, b2):
    """KarateClub special case (x == I, num_nodes == input_dim): the forward
    depends on no runtime input, so it is a constant — computed with plain XLA,
    no Pallas kernel needed (per review). Batched graphs are tiles of this."""
    h = jnp.maximum(w1_t + b1, 0.0)          # I @ W1 == W1
    z = h @ w2_t + b2
    return jax.nn.log_softmax(z, axis=-1)


def init_linear_params(key, in_features, out_features):
    """Deterministic init mimicking torch.nn.Linear's uniform(-1/sqrt(fan_in), ...)."""
    kw, kb = jax.random.split(key)
    bound = 1.0 / jnp.sqrt(jnp.float32(in_features))
    # Stored transposed: (in_features, out_features) so kernel does x @ W.
    w_t = jax.random.uniform(
        kw, (in_features, out_features), jnp.float32, minval=-bound, maxval=bound
    )
    b = jax.random.uniform(
        kb, (1, out_features), jnp.float32, minval=-bound, maxval=bound
    )
    return w_t, b


if __name__ == "__main__":
    # KarateClub: 34 nodes, 34 features (one-hot identity), 4 classes.
    num_nodes = 34
    input_dim = 34
    hidden_dim = 16
    output_dim = 4
    num_graphs = 8  # batch several graph instances along the row axis

    key = jax.random.PRNGKey(0)
    k_fc1, k_fc2 = jax.random.split(key, 2)

    w1_t, b1 = init_linear_params(k_fc1, input_dim, hidden_dim)
    w2_t, b2 = init_linear_params(k_fc2, hidden_dim, output_dim)

    # KarateClub node features are the identity matrix (deterministic).
    x_single = jnp.eye(num_nodes, input_dim, dtype=jnp.float32)
    # Stack G graph instances along the row axis -> (272, 34); 272 % 8 == 0 so
    # the Pallas call runs as a single (272, 34) block, grid=(1,), zero padding.
    x_batched = jnp.tile(x_single, (num_graphs, 1))

    # General batched Pallas path (single grid step at this size).
    out_batched = jax.block_until_ready(dnn_forward(x_batched, w1_t, b1, w2_t, b2))

    # Identity-feature constant precompute (plain XLA, no pallas_call).
    out_ident = jax.block_until_ready(dnn_identity_precompute(w1_t, b1, w2_t, b2))

    # Correctness against a pure-JAX reference.
    ref = dnn_reference(x_batched, w1_t, b1, w2_t, b2)
    assert out_batched.shape == (num_graphs * num_nodes, output_dim)
    assert jnp.allclose(out_batched, ref, atol=1e-5), "batched kernel mismatch"
    assert jnp.allclose(out_ident, ref[:num_nodes], atol=1e-5), "identity precompute mismatch"

    # sanity: log_softmax rows must exp-sum to 1
    row_sums = jnp.exp(out_batched).sum(axis=1)
    assert jnp.allclose(row_sums, jnp.ones_like(row_sums), atol=1e-5)

    print("KERNEL_OK")
</pallas_src>

<mosaic_0001>
module attributes {stable_mosaic.version = 11 : i64} {
  func.func @dnn_rows_kernel(%arg0: i32, %arg1: memref<272x34xf32, #tpu.memory_space<vmem>>, %arg2: memref<34x16xf32, #tpu.memory_space<vmem>>, %arg3: memref<1x16xf32, #tpu.memory_space<vmem>>, %arg4: memref<16x4xf32, #tpu.memory_space<vmem>>, %arg5: memref<1x4xf32, #tpu.memory_space<vmem>>, %arg6: memref<272x4xf32, #tpu.memory_space<vmem>>) attributes {dimension_semantics = [#tpu.dimension_semantics<parallel>], iteration_bounds = array<i64: 1>, scalar_prefetch = 0 : i64, scratch_operands = 0 : i64, tpu.core_type = #tpu.core_type<tc>, window_params = [{transform_indices = @transform_0, window_bounds = array<i64: 272, 34>}, {pipeline_mode = #tpu.pipeline_mode<synchronous>, transform_indices = @transform_1, window_bounds = array<i64: 34, 16>}, {pipeline_mode = #tpu.pipeline_mode<synchronous>, transform_indices = @transform_2, window_bounds = array<i64: 1, 16>}, {pipeline_mode = #tpu.pipeline_mode<synchronous>, transform_indices = @transform_3, window_bounds = array<i64: 16, 4>}, {pipeline_mode = #tpu.pipeline_mode<synchronous>, transform_indices = @transform_4, window_bounds = array<i64: 1, 4>}, {transform_indices = @transform_5, window_bounds = array<i64: 272, 4>}]} {
    %c0 = arith.constant 0 : index
    %c0_0 = arith.constant 0 : index
    %0 = vector.load %arg1[%c0, %c0_0] : memref<272x34xf32, #tpu.memory_space<vmem>>, vector<272x34xf32>
    %c0_1 = arith.constant 0 : index
    %c0_2 = arith.constant 0 : index
    %1 = vector.load %arg2[%c0_1, %c0_2] : memref<34x16xf32, #tpu.memory_space<vmem>>, vector<34x16xf32>
    %cst = arith.constant dense<0.000000e+00> : vector<272x16xf32>
    %2 = tpu.matmul %0, %1, %cst {dimension_numbers = #tpu.dot_dimension_numbers<[1], [0], [0], [1], [0, 0, 1, 1], [], []>} : vector<272x34xf32>, vector<34x16xf32>, vector<272x16xf32> -> vector<272x16xf32>
    %c0_3 = arith.constant 0 : index
    %c0_4 = arith.constant 0 : index
    %3 = vector.load %arg3[%c0_3, %c0_4] : memref<1x16xf32, #tpu.memory_space<vmem>>, vector<1x16xf32>
    %4 = vector.broadcast %3 : vector<1x16xf32> to vector<272x16xf32>
    %5 = arith.addf %2, %4 : vector<272x16xf32>
    %cst_5 = arith.constant 0.000000e+00 : f32
    %6 = vector.broadcast %cst_5 : f32 to vector<272x16xf32>
    %7 = arith.maximumf %5, %6 : vector<272x16xf32>
    %c0_6 = arith.constant 0 : index
    %c0_7 = arith.constant 0 : index
    %8 = vector.load %arg4[%c0_6, %c0_7] : memref<16x4xf32, #tpu.memory_space<vmem>>, vector<16x4xf32>
    %cst_8 = arith.constant dense<0.000000e+00> : vector<272x4xf32>
    %9 = tpu.matmul %7, %8, %cst_8 {dimension_numbers = #tpu.dot_dimension_numbers<[1], [0], [0], [1], [0, 0, 1, 1], [], []>} : vector<272x16xf32>, vector<16x4xf32>, vector<272x4xf32> -> vector<272x4xf32>
    %c0_9 = arith.constant 0 : index
    %c0_10 = arith.constant 0 : index
    %10 = vector.load %arg5[%c0_9, %c0_10] : memref<1x4xf32, #tpu.memory_space<vmem>>, vector<1x4xf32>
    %11 = vector.broadcast %10 : vector<1x4xf32> to vector<272x4xf32>
    %12 = arith.addf %9, %11 : vector<272x4xf32>
    %cst_11 = arith.constant dense<0xFF800000> : vector<272xf32>
    %13 = vector.multi_reduction <maximumf>, %12, %cst_11 [1] : vector<272x4xf32> to vector<272xf32>
    %14 = vector.shape_cast %13 : vector<272xf32> to vector<272x1xf32>
    %15 = vector.broadcast %14 : vector<272x1xf32> to vector<272x4xf32>
    %16 = arith.subf %12, %15 : vector<272x4xf32>
    %17 = math.exp %16 : vector<272x4xf32>
    %cst_12 = arith.constant dense<0.000000e+00> : vector<272xf32>
    %18 = vector.multi_reduction <add>, %17, %cst_12 [1] : vector<272x4xf32> to vector<272xf32>
    %19 = vector.shape_cast %18 : vector<272xf32> to vector<272x1xf32>
    %20 = math.log %19 : vector<272x1xf32>
    %21 = vector.broadcast %20 : vector<272x1xf32> to vector<272x4xf32>
    %22 = arith.subf %16, %21 : vector<272x4xf32>
    %c0_13 = arith.constant 0 : index
    %c0_14 = arith.constant 0 : index
    %23 = vector.load %arg6[%c0_13, %c0_14] : memref<272x4xf32, #tpu.memory_space<vmem>>, vector<272x4xf32>
    tpu.vector_store %arg6[%c0_13, %c0_14], %22 {strides = array<i32>} : memref<272x4xf32, #tpu.memory_space<vmem>>, vector<272x4xf32>,
    return
  }
  func.func @transform_0(%arg0: i32) -> (i32, i32) {
    %c0_i32 = arith.constant 0 : i32
    %c0_i32_0 = arith.constant 0 : i32
    return %arg0, %c0_i32 : i32, i32
  }
  func.func @transform_1(%arg0: i32) -> (i32, i32) {
    %c0_i32 = arith.constant 0 : i32
    %c0_i32_0 = arith.constant 0 : i32
    %c0_i32_1 = arith.constant 0 : i32
    return %c0_i32, %c0_i32_0 : i32, i32
  }
  func.func @transform_2(%arg0: i32) -> (i32, i32) {
    %c0_i32 = arith.constant 0 : i32
    %c0_i32_0 = arith.constant 0 : i32
    %c0_i32_1 = arith.constant 0 : i32
    return %c0_i32, %c0_i32_0 : i32, i32
  }
  func.func @transform_3(%arg0: i32) -> (i32, i32) {
    %c0_i32 = arith.constant 0 : i32
    %c0_i32_0 = arith.constant 0 : i32
    %c0_i32_1 = arith.constant 0 : i32
    return %c0_i32, %c0_i32_0 : i32, i32
  }
  func.func @transform_4(%arg0: i32) -> (i32, i32) {
    %c0_i32 = arith.constant 0 : i32
    %c0_i32_0 = arith.constant 0 : i32
    %c0_i32_1 = arith.constant 0 : i32
    return %c0_i32, %c0_i32_0 : i32, i32
  }
  func.func @transform_5(%arg0: i32) -> (i32, i32) {
    %c0_i32 = arith.constant 0 : i32
    %c0_i32_0 = arith.constant 0 : i32
    return %arg0, %c0_i32 : i32, i32
  }
}

</mosaic_0001>

<llo_original>
// kernel: dnn_forward.1
$region0: #{dnn_forward.1}
  #allocation0 [shape = 'u32[]', space=smem, size = 0x4, offset = 0x4, fixed_abs, tag = 'smem constant byte address 0x4 - core index']
  #allocation1 [shape = 'u32[144,128]{1,0:T(1,128)}', space=vmem, size = 0x12000, scoped, tag = 'internal scratch']
  %s0 = inlined_call_operand.vmem [shape: f32[272,34], index: 0, kind: input, shape index: {}]
  %s1 = inlined_call_operand.vmem [shape: f32[34,16], index: 1, kind: input, shape index: {}]
  %s2 = inlined_call_operand.vmem [shape: f32[1,16], index: 2, kind: input, shape index: {}]
  %s3 = inlined_call_operand.vmem [shape: f32[16,4], index: 3, kind: input, shape index: {}]
  %s4 = inlined_call_operand.vmem [shape: f32[1,4], index: 4, kind: input, shape index: {}]
  %s5 = inlined_call_operand.vmem [shape: f32[272,4], index: 5, kind: output, shape index: {}]
  %s6 = sld [smem:[#allocation0]]
  $region30: #{dnn_forward.1} parent=0
    _
  %s8 = ssub.s32 1, %s6
  %s9 = scalar_select 0, %s8, %s6
  // Predicated region
  $region2: #{dnn_forward.1} parent=0 // pred_check
    _
  $region3: #{dnn_forward.1} parent=0 // pred_check_branch
    %11 = sbr.rel (0) target = $region5
  $region4: #{dnn_forward.1} parent=0 // pred_region
    _
  $region5: #{dnn_forward.1} parent=0 // pred_fallthru
    _
  // Predicated region
  $region6: #{dnn_forward.1} parent=0 // pred_check
    _
  $region7: #{dnn_forward.1} parent=0 // pred_check_branch
    %13 = sbr.rel (0) target = $region9
  $region8: #{dnn_forward.1} parent=0 // pred_region
    _
  $region9: #{dnn_forward.1} parent=0 // pred_fallthru
    _
  // Predicated region
  $region10: #{dnn_forward.1} parent=0 // pred_check
    _
  $region11: #{dnn_forward.1} parent=0 // pred_check_branch
    %15 = sbr.rel (0) target = $region13
  $region12: #{dnn_forward.1} parent=0 // pred_region
    _
  $region13: #{dnn_forward.1} parent=0 // pred_fallthru
    _
  // Predicated region
  $region14: #{dnn_forward.1} parent=0 // pred_check
    _
  $region15: #{dnn_forward.1} parent=0 // pred_check_branch
    %17 = sbr.rel (0) target = $region17
  $region16: #{dnn_forward.1} parent=0 // pred_region
    _
  $region17: #{dnn_forward.1} parent=0 // pred_fallthru
    _
  // Predicated region
  $region18: #{dnn_forward.1} parent=0 // pred_check
    _
  $region19: #{dnn_forward.1} parent=0 // pred_check_branch
    %19 = sbr.rel (0) target = $region21
  $region20: #{dnn_forward.1} parent=0 // pred_region
    _
  $region21: #{dnn_forward.1} parent=0 // pred_fallthru
    _
  %v20 = vld [vmem:[%s0] sm:$0xff]
  %v21 = vld [vmem:[%s0 + $0x8] sm:$0xff]
  %v22 = vld [vmem:[%s0 + $0x10] sm:$0xff]
  %v23 = vld [vmem:[%s0 + $0x18] sm:$0xff]
  %v24 = vld [vmem:[%s0 + $0x20] sm:$0xff]
  %v25 = vld [vmem:[%s0 + $0x28] sm:$0xff]
  %v26 = vld [vmem:[%s0 + $0x30] sm:$0xff]
  %v27 = vld [vmem:[%s0 + $0x38] sm:$0xff]
  %v28 = vld [vmem:[%s0 + $0x40] sm:$0xff]
  %v29 = vld [vmem:[%s0 + $0x48] sm:$0xff]
  %v30 = vld [vmem:[%s0 + $0x50] sm:$0xff]
  %v31 = vld [vmem:[%s0 + $0x58] sm:$0xff]
  %v32 = vld [vmem:[%s0 + $0x60] sm:$0xff]
  %v33 = vld [vmem:[%s0 + $0x68] sm:$0xff]
  %v34 = vld [vmem:[%s0 + $0x70] sm:$0xff]
  %v35 = vld [vmem:[%s0 + $0x78] sm:$0xff]
  %v36 = vld [vmem:[%s0 + $0x80] sm:$0xff]
  %v37 = vld [vmem:[%s0 + $0x88] sm:$0xff]
  %v38 = vld [vmem:[%s0 + $0x90] sm:$0xff]
  %v39 = vld [vmem:[%s0 + $0x98] sm:$0xff]
  %v40 = vld [vmem:[%s0 + $0xa0] sm:$0xff]
  %v41 = vld [vmem:[%s0 + $0xa8] sm:$0xff]
  %v42 = vld [vmem:[%s0 + $0xb0] sm:$0xff]
  %v43 = vld [vmem:[%s0 + $0xb8] sm:$0xff]
  %v44 = vld [vmem:[%s0 + $0xc0] sm:$0xff]
  %v45 = vld [vmem:[%s0 + $0xc8] sm:$0xff]
  %v46 = vld [vmem:[%s0 + $0xd0] sm:$0xff]
  %v47 = vld [vmem:[%s0 + $0xd8] sm:$0xff]
  %v48 = vld [vmem:[%s0 + $0xe0] sm:$0xff]
  %v49 = vld [vmem:[%s0 + $0xe8] sm:$0xff]
  %v50 = vld [vmem:[%s0 + $0xf0] sm:$0xff]
  %v51 = vld [vmem:[%s0 + $0xf8] sm:$0xff]
  %v52 = vld [vmem:[%s0 + $0x100] sm:$0xff]
  %v53 = vld [vmem:[%s0 + $0x108] sm:$0xff]
  %v54 = vld [vmem:[%s1] sm:$0xff]
  %v55 = vld [vmem:[%s1 + $0x8] sm:$0xff]
  %v56 = vld [vmem:[%s1 + $0x10] sm:$0xff]
  %v57 = vld [vmem:[%s1 + $0x18] sm:$0xff]
  %v58 = vld [vmem:[%s1 + $0x20] sm:$0x3]
  %v59 = vld [vmem:[%s2] sm:$0x1]
  %v61 = vlaneseq
  %v62 = vshrl.u32 %v61, 7
  %v63 = vsub.s32 0, %v62
  %v64 = vrot.slane %v59, %v63
  %vm66 = vcmask 277504
  %v68 = vsel %vm66, %v20, 0
  %v71 = vsel %vm66, %v21, 0
  %v74 = vsel %vm66, %v22, 0
  %v77 = vsel %vm66, %v23, 0
  %v80 = vsel %vm66, %v24, 0
  %v83 = vsel %vm66, %v25, 0
  %v86 = vsel %vm66, %v26, 0
  %v89 = vsel %vm66, %v27, 0
  %v92 = vsel %vm66, %v28, 0
  %v95 = vsel %vm66, %v29, 0
  %v98 = vsel %vm66, %v30, 0
  %v101 = vsel %vm66, %v31, 0
  %v104 = vsel %vm66, %v32, 0
  %v107 = vsel %vm66, %v33, 0
  %v110 = vsel %vm66, %v34, 0
  %v113 = vsel %vm66, %v35, 0
  %v116 = vsel %vm66, %v36, 0
  %v119 = vsel %vm66, %v37, 0
  %v122 = vsel %vm66, %v38, 0
  %v125 = vsel %vm66, %v39, 0
  %v128 = vsel %vm66, %v40, 0
  %v131 = vsel %vm66, %v41, 0
  %v134 = vsel %vm66, %v42, 0
  %v137 = vsel %vm66, %v43, 0
  %v140 = vsel %vm66, %v44, 0
  %v143 = vsel %vm66, %v45, 0
  %v146 = vsel %vm66, %v46, 0
  %v149 = vsel %vm66, %v47, 0
  %v152 = vsel %vm66, %v48, 0
  %v155 = vsel %vm66, %v49, 0
  %v158 = vsel %vm66, %v50, 0
  %v161 = vsel %vm66, %v51, 0
  %v164 = vsel %vm66, %v52, 0
  %v167 = vsel %vm66, %v53, 0
  %vm169 = vcmask 1041408
  %v171 = vsel %vm169, %v58, 0
  %173 = vmatprep.subr.mxu0 0.0
  %174 = vmatpush1.msra.mxu0 %v54
  %175 = vmatprep.subr.mxu0 0.0
  %176 = vmatpush1.msra.mxu0 %v55
  %177 = vmatprep.subr.mxu0 0.0
  %178 = vmatpush1.msra.mxu0 %v56
  %179 = vmatprep.subr.mxu0 0.0
  %180 = vmatpush1.msra.mxu0 %v57
  %181 = vmatprep.subr.mxu0 0.0
  %182 = vmatpush1.msra.mxu0 %v171
  %183 = vmatprep.subr.mxu0 0.0
  %184 = vmatpush1.msra.mxu0 0.0
  %185 = vmatprep.subr.mxu0 0.0
  %186 = vmatpush1.msra.mxu0 0.0
  %187 = vmatprep.subr.mxu0 0.0
  %188 = vmatpush1.msra.mxu0 0.0
  %189 = vmatprep.subr.mxu0 0.0
  %190 = vmatpush1.msra.mxu0 0.0
  %191 = vmatprep.subr.mxu0 0.0
  %192 = vmatpush1.msra.mxu0 0.0
  %193 = vmatprep.subr.mxu0 0.0
  %194 = vmatpush1.msra.mxu0 0.0
  %195 = vmatprep.subr.mxu0 0.0
  %196 = vmatpush1.msra.mxu0 0.0
  %197 = vmatprep.subr.mxu0 0.0
  %198 = vmatpush1.msra.mxu0 0.0
  %199 = vmatprep.subr.mxu0 0.0
  %200 = vmatpush1.msra.mxu0 0.0
  %201 = vmatprep.subr.mxu0 0.0
  %202 = vmatpush1.msra.mxu0 0.0
  %203 = vmatprep.subr.mxu0 0.0
  %204 = vmatpush1.msra.mxu0 0.0
  %205 = vmatprep.subr.mxu0 0.0
  %206 = vmatpush1.msra.mxu0 0.0
  %207 = vmatprep.subr.mxu0 0.0
  %208 = vmatpush1.msra.mxu0 0.0
  %209 = vmatprep.subr.mxu0 0.0
  %210 = vmatpush1.msra.mxu0 0.0
  %211 = vmatprep.subr.mxu0 0.0
  %212 = vmatpush1.msra.mxu0 0.0
  %213 = vmatprep.subr.mxu0 0.0
  %214 = vmatpush1.msra.mxu0 0.0
  %215 = vmatprep.subr.mxu0 0.0
  %216 = vmatpush1.msra.mxu0 0.0
  %217 = vmatprep.subr.mxu0 0.0
  %218 = vmatpush1.msra.mxu0 0.0
  %219 = vmatprep.subr.mxu0 0.0
  %220 = vmatpush1.msra.mxu0 0.0
  %221 = vmatprep.subr.mxu0 0.0
  %222 = vmatpush1.msra.mxu0 0.0
  %223 = vmatprep.subr.mxu0 0.0
  %224 = vmatpush1.msra.mxu0 0.0
  %225 = vmatprep.subr.mxu0 0.0
  %226 = vmatpush1.msra.mxu0 0.0
  %227 = vmatprep.subr.mxu0 0.0
  %228 = vmatpush1.msra.mxu0 0.0
  %229 = vmatprep.subr.mxu0 0.0
  %230 = vmatpush1.msra.mxu0 0.0
  %231 = vmatprep.subr.mxu0 0.0
  %232 = vmatpush1.msra.mxu0 0.0
  %233 = vmatprep.subr.mxu0 0.0
  %234 = vmatpush1.msra.mxu0 0.0
  %235 = vmatprep.subr.mxu0 0.0
  %236 = vmatpush1.msra.mxu0 0.0
  %237 = vmatprep.mubr.f32.mxu0 0.0
  %238 = vmatmul.mubr.f32.gmra.mrb[0].mxu0 %v68
  %v239 = vpop.f32.mrb[0].mxu0
  %v240 = vadd.f32 %v64, %v239
  %v241 = vpop.f32.mrb[0].mxu0
  %242 = vmatprep.mubr.f32.mxu0 0.0
  %243 = vmatmul.mubr.f32.gmra.mrb[0].mxu0 %v71
  %v244 = vpop.f32.mrb[0].mxu0
  %v245 = vadd.f32 %v64, %v244
  %v246 = vpop.f32.mrb[0].mxu0
  %247 = vmatprep.mubr.f32.mxu0 0.0
  %248 = vmatmul.mubr.f32.gmra.mrb[0].mxu0 %v74
  %v249 = vpop.f32.mrb[0].mxu0
  %v250 = vadd.f32 %v64, %v249
  %v251 = vpop.f32.mrb[0].mxu0
  %252 = vmatprep.mubr.f32.mxu0 0.0
  %253 = vmatmul.mubr.f32.gmra.mrb[0].mxu0 %v77
  %v254 = vpop.f32.mrb[0].mxu0
  %v255 = vadd.f32 %v64, %v254
  %v256 = vpop.f32.mrb[0].mxu0
  %257 = vmatprep.mubr.f32.mxu0 0.0
  %258 = vmatmul.mubr.f32.gmra.mrb[0].mxu0 %v80
  %v259 = vpop.f32.mrb[0].mxu0
  %v260 = vadd.f32 %v64, %v259
  %v261 = vpop.f32.mrb[0].mxu0
  %262 = vmatprep.mubr.f32.mxu0 0.0
  %263 = vmatmul.mubr.f32.gmra.mrb[0].mxu0 %v83
  %v264 = vpop.f32.mrb[0].mxu0
  %v265 = vadd.f32 %v64, %v264
  %v266 = vpop.f32.mrb[0].mxu0
  %267 = vmatprep.mubr.f32.mxu0 0.0
  %268 = vmatmul.mubr.f32.gmra.mrb[0].mxu0 %v86
  %v269 = vpop.f32.mrb[0].mxu0
  %v270 = vadd.f32 %v64, %v269
  %v271 = vpop.f32.mrb[0].mxu0
  %272 = vmatprep.mubr.f32.mxu0 0.0
  %273 = vmatmul.mubr.f32.gmra.mrb[0].mxu0 %v89
  %v274 = vpop.f32.mrb[0].mxu0
  %v275 = vadd.f32 %v64, %v274
  %v276 = vpop.f32.mrb[0].mxu0
  %277 = vmatprep.mubr.f32.mxu0 0.0
  %278 = vmatmul.mubr.f32.gmra.mrb[0].mxu0 %v92
  %v279 = vpop.f32.mrb[0].mxu0
  %v280 = vadd.f32 %v64, %v279
  %v281 = vpop.f32.mrb[0].mxu0
  %282 = vmatprep.mubr.f32.mxu0 0.0
  %283 = vmatmul.mubr.f32.gmra.mrb[0].mxu0 %v95
  %v284 = vpop.f32.mrb[0].mxu0
  %v285 = vadd.f32 %v64, %v284
  %v286 = vpop.f32.mrb[0].mxu0
  %287 = vmatprep.mubr.f32.mxu0 0.0
  %288 = vmatmul.mubr.f32.gmra.mrb[0].mxu0 %v98
  %v289 = vpop.f32.mrb[0].mxu0
  %v290 = vadd.f32 %v64, %v289
  %v291 = vpop.f32.mrb[0].mxu0
  %292 = vmatprep.mubr.f32.mxu0 0.0
  %293 = vmatmul.mubr.f32.gmra.mrb[0].mxu0 %v101
  %v294 = vpop.f32.mrb[0].mxu0
  %v295 = vadd.f32 %v64, %v294
  %v296 = vpop.f32.mrb[0].mxu0
  %297 = vmatprep.mubr.f32.mxu0 0.0
  %298 = vmatmul.mubr.f32.gmra.mrb[0].mxu0 %v104
  %v299 = vpop.f32.mrb[0].mxu0
  %v300 = vadd.f32 %v64, %v299
  %v301 = vpop.f32.mrb[0].mxu0
  %302 = vmatprep.mubr.f32.mxu0 0.0
  %303 = vmatmul.mubr.f32.gmra.mrb[0].mxu0 %v107
  %v304 = vpop.f32.mrb[0].mxu0
  %v305 = vadd.f32 %v64, %v304
  %v306 = vpop.f32.mrb[0].mxu0
  %307 = vmatprep.mubr.f32.mxu0 0.0
  %308 = vmatmul.mubr.f32.gmra.mrb[0].mxu0 %v110
  %v309 = vpop.f32.mrb[0].mxu0
  %v310 = vadd.f32 %v64, %v309
  %v311 = vpop.f32.mrb[0].mxu0
  %312 = vmatprep.mubr.f32.mxu0 0.0
  %313 = vmatmul.mubr.f32.gmra.mrb[0].mxu0 %v113
  %v314 = vpop.f32.mrb[0].mxu0
  %v315 = vadd.f32 %v64, %v314
  %v316 = vpop.f32.mrb[0].mxu0
  %317 = vmatprep.mubr.f32.mxu0 0.0
  %318 = vmatmul.mubr.f32.gmra.mrb[0].mxu0 %v116
  %v319 = vpop.f32.mrb[0].mxu0
  %v320 = vadd.f32 %v64, %v319
  %v321 = vpop.f32.mrb[0].mxu0
  %322 = vmatprep.mubr.f32.mxu0 0.0
  %323 = vmatmul.mubr.f32.gmra.mrb[0].mxu0 %v119
  %v324 = vpop.f32.mrb[0].mxu0
  %v325 = vadd.f32 %v64, %v324
  %v326 = vpop.f32.mrb[0].mxu0
  %327 = vmatprep.mubr.f32.mxu0 0.0
  %328 = vmatmul.mubr.f32.gmra.mrb[0].mxu0 %v122
  %v329 = vpop.f32.mrb[0].mxu0
  %v330 = vadd.f32 %v64, %v329
  %v331 = vpop.f32.mrb[0].mxu0
  %332 = vmatprep.mubr.f32.mxu0 0.0
  %333 = vmatmul.mubr.f32.gmra.mrb[0].mxu0 %v125
  %v334 = vpop.f32.mrb[0].mxu0
  %v335 = vadd.f32 %v64, %v334
  %v336 = vpop.f32.mrb[0].mxu0
  %337 = vmatprep.mubr.f32.mxu0 0.0
  %338 = vmatmul.mubr.f32.gmra.mrb[0].mxu0 %v128
  %v339 = vpop.f32.mrb[0].mxu0
  %v340 = vadd.f32 %v64, %v339
  %v341 = vpop.f32.mrb[0].mxu0
  %342 = vmatprep.mubr.f32.mxu0 0.0
  %343 = vmatmul.mubr.f32.gmra.mrb[0].mxu0 %v131
  %v344 = vpop.f32.mrb[0].mxu0
  %v345 = vadd.f32 %v64, %v344
  %v346 = vpop.f32.mrb[0].mxu0
  %347 = vmatprep.mubr.f32.mxu0 0.0
  %348 = vmatmul.mubr.f32.gmra.mrb[0].mxu0 %v134
  %v349 = vpop.f32.mrb[0].mxu0
  %v350 = vadd.f32 %v64, %v349
  %v351 = vpop.f32.mrb[0].mxu0
  %352 = vmatprep.mubr.f32.mxu0 0.0
  %353 = vmatmul.mubr.f32.gmra.mrb[0].mxu0 %v137
  %v354 = vpop.f32.mrb[0].mxu0
  %v355 = vadd.f32 %v64, %v354
  %v356 = vpop.f32.mrb[0].mxu0
  %357 = vmatprep.mubr.f32.mxu0 0.0
  %358 = vmatmul.mubr.f32.gmra.mrb[0].mxu0 %v140
  %v359 = vpop.f32.mrb[0].mxu0
  %v360 = vadd.f32 %v64, %v359
  %v361 = vpop.f32.mrb[0].mxu0
  %362 = vmatprep.mubr.f32.mxu0 0.0
  %363 = vmatmul.mubr.f32.gmra.mrb[0].mxu0 %v143
  %v364 = vpop.f32.mrb[0].mxu0
  %v365 = vadd.f32 %v64, %v364
  %v366 = vpop.f32.mrb[0].mxu0
  %367 = vmatprep.mubr.f32.mxu0 0.0
  %368 = vmatmul.mubr.f32.gmra.mrb[0].mxu0 %v146
  %v369 = vpop.f32.mrb[0].mxu0
  %v370 = vadd.f32 %v64, %v369
  %v371 = vpop.f32.mrb[0].mxu0
  %372 = vmatprep.mubr.f32.mxu0 0.0
  %373 = vmatmul.mubr.f32.gmra.mrb[0].mxu0 %v149
  %v374 = vpop.f32.mrb[0].mxu0
  %v375 = vadd.f32 %v64, %v374
  %v376 = vpop.f32.mrb[0].mxu0
  %377 = vmatprep.mubr.f32.mxu0 0.0
  %378 = vmatmul.mubr.f32.gmra.mrb[0].mxu0 %v152
  %v379 = vpop.f32.mrb[0].mxu0
  %v380 = vadd.f32 %v64, %v379
  %v381 = vpop.f32.mrb[0].mxu0
  %382 = vmatprep.mubr.f32.mxu0 0.0
  %383 = vmatmul.mubr.f32.gmra.mrb[0].mxu0 %v155
  %v384 = vpop.f32.mrb[0].mxu0
  %v385 = vadd.f32 %v64, %v384
  %v386 = vpop.f32.mrb[0].mxu0
  %387 = vmatprep.mubr.f32.mxu0 0.0
  %388 = vmatmul.mubr.f32.gmra.mrb[0].mxu0 %v158
  %v389 = vpop.f32.mrb[0].mxu0
  %v390 = vadd.f32 %v64, %v389
  %v391 = vpop.f32.mrb[0].mxu0
  %392 = vmatprep.mubr.f32.mxu0 0.0
  %393 = vmatmul.mubr.f32.gmra.mrb[0].mxu0 %v161
  %v394 = vpop.f32.mrb[0].mxu0
  %v395 = vadd.f32 %v64, %v394
  %v396 = vpop.f32.mrb[0].mxu0
  %397 = vmatprep.mubr.f32.mxu0 0.0
  %398 = vmatmul.mubr.f32.gmra.mrb[0].mxu0 %v164
  %v399 = vpop.f32.mrb[0].mxu0
  %v400 = vadd.f32 %v64, %v399
  %v401 = vpop.f32.mrb[0].mxu0
  %402 = vmatprep.mubr.f32.mxu0 0.0
  %403 = vmatmul.mubr.f32.gmra.mrb[0].mxu0 %v167
  %v404 = vpop.f32.mrb[0].mxu0
  %v405 = vadd.f32 %v64, %v404
  %v406 = vpop.f32.mrb[0].mxu0
  %407 = vdwg.mxu0
  %v408 = vmax.f32 %v240, 0.0
  %v409 = vmax.f32 %v245, 0.0
  %v410 = vmax.f32 %v250, 0.0
  %v411 = vmax.f32 %v255, 0.0
  %v412 = vmax.f32 %v260, 0.0
  %v413 = vmax.f32 %v265, 0.0
  %v414 = vmax.f32 %v270, 0.0
  %v415 = vmax.f32 %v275, 0.0
  %v416 = vmax.f32 %v280, 0.0
  %v417 = vmax.f32 %v285, 0.0
  %v418 = vmax.f32 %v290, 0.0
  %v419 = vmax.f32 %v295, 0.0
  %v420 = vmax.f32 %v300, 0.0
  %v421 = vmax.f32 %v305, 0.0
  %v422 = vmax.f32 %v310, 0.0
  %v423 = vmax.f32 %v315, 0.0
  %v424 = vmax.f32 %v320, 0.0
  %v425 = vmax.f32 %v325, 0.0
  %v426 = vmax.f32 %v330, 0.0
  %v427 = vmax.f32 %v335, 0.0
  %v428 = vmax.f32 %v340, 0.0
  %v429 = vmax.f32 %v345, 0.0
  %v430 = vmax.f32 %v350, 0.0
  %v431 = vmax.f32 %v355, 0.0
  %v432 = vmax.f32 %v360, 0.0
  %v433 = vmax.f32 %v365, 0.0
  %v434 = vmax.f32 %v370, 0.0
  %v435 = vmax.f32 %v375, 0.0
  %v436 = vmax.f32 %v380, 0.0
  %v437 = vmax.f32 %v385, 0.0
  %v438 = vmax.f32 %v390, 0.0
  %v439 = vmax.f32 %v395, 0.0
  %v440 = vmax.f32 %v400, 0.0
  %v441 = vmax.f32 %v405, 0.0
  %v442 = vld [vmem:[%s3] sm:$0xff]
  %v443 = vld [vmem:[%s3 + $0x8] sm:$0xff]
  %v444 = vld [vmem:[%s4] sm:$0x1]
  %v446 = vlaneseq
  %v447 = vshrl.u32 %v446, 7
  %v448 = vsub.s32 0, %v447
  %v449 = vrot.slane %v444, %v448
  %vm451 = vcmask 130048
  %v453 = vsel %vm451, %v408, 0
  %v456 = vsel %vm451, %v409, 0
  %v459 = vsel %vm451, %v410, 0
  %v462 = vsel %vm451, %v411, 0
  %v465 = vsel %vm451, %v412, 0
  %v468 = vsel %vm451, %v413, 0
  %v471 = vsel %vm451, %v414, 0
  %v474 = vsel %vm451, %v415, 0
  %v477 = vsel %vm451, %v416, 0
  %v480 = vsel %vm451, %v417, 0
  %v483 = vsel %vm451, %v418, 0
  %v486 = vsel %vm451, %v419, 0
  %v489 = vsel %vm451, %v420, 0
  %v492 = vsel %vm451, %v421, 0
  %v495 = vsel %vm451, %v422, 0
  %v498 = vsel %vm451, %v423, 0
  %v501 = vsel %vm451, %v424, 0
  %v504 = vsel %vm451, %v425, 0
  %v507 = vsel %vm451, %v426, 0
  %v510 = vsel %vm451, %v427, 0
  %v513 = vsel %vm451, %v428, 0
  %v516 = vsel %vm451, %v429, 0
  %v519 = vsel %vm451, %v430, 0
  %v522 = vsel %vm451, %v431, 0
  %v525 = vsel %vm451, %v432, 0
  %v528 = vsel %vm451, %v433, 0
  %v531 = vsel %vm451, %v434, 0
  %v534 = vsel %vm451, %v435, 0
  %v537 = vsel %vm451, %v436, 0
  %v540 = vsel %vm451, %v437, 0
  %v543 = vsel %vm451, %v438, 0
  %v546 = vsel %vm451, %v439, 0
  %v549 = vsel %vm451, %v440, 0
  %v552 = vsel %vm451, %v441, 0
  %554 = vmatprep.subr.mxu0 0.0
  %555 = vmatpush1.msra.mxu0 %v442
  %556 = vmatprep.subr.mxu0 0.0
  %557 = vmatpush1.msra.mxu0 %v443
  %558 = vmatprep.subr.mxu0 0.0
  %559 = vmatpush1.msra.mxu0 0.0
  %560 = vmatprep.subr.mxu0 0.0
  %561 = vmatpush1.msra.mxu0 0.0
  %562 = vmatprep.subr.mxu0 0.0
  %563 = vmatpush1.msra.mxu0 0.0
  %564 = vmatprep.subr.mxu0 0.0
  %565 = vmatpush1.msra.mxu0 0.0
  %566 = vmatprep.subr.mxu0 0.0
  %567 = vmatpush1.msra.mxu0 0.0
  %568 = vmatprep.subr.mxu0 0.0
  %569 = vmatpush1.msra.mxu0 0.0
  %570 = vmatprep.subr.mxu0 0.0
  %571 = vmatpush1.msra.mxu0 0.0
  %572 = vmatprep.subr.mxu0 0.0
  %573 = vmatpush1.msra.mxu0 0.0
  %574 = vmatprep.subr.mxu0 0.0
  %575 = vmatpush1.msra.mxu0 0.0
  %576 = vmatprep.subr.mxu0 0.0
  %577 = vmatpush1.msra.mxu0 0.0
  %578 = vmatprep.subr.mxu0 0.0
  %579 = vmatpush1.msra.mxu0 0.0
  %580 = vmatprep.subr.mxu0 0.0
  %581 = vmatpush1.msra.mxu0 0.0
  %582 = vmatprep.subr.mxu0 0.0
  %583 = vmatpush1.msra.mxu0 0.0
  %584 = vmatprep.subr.mxu0 0.0
  %585 = vmatpush1.msra.mxu0 0.0
  %586 = vmatprep.subr.mxu0 0.0
  %587 = vmatpush1.msra.mxu0 0.0
  %588 = vmatprep.subr.mxu0 0.0
  %589 = vmatpush1.msra.mxu0 0.0
  %590 = vmatprep.subr.mxu0 0.0
  %591 = vmatpush1.msra.mxu0 0.0
  %592 = vmatprep.subr.mxu0 0.0
  %593 = vmatpush1.msra.mxu0 0.0
  %594 = vmatprep.subr.mxu0 0.0
  %595 = vmatpush1.msra.mxu0 0.0
  %596 = vmatprep.subr.mxu0 0.0
  %597 = vmatpush1.msra.mxu0 0.0
  %598 = vmatprep.subr.mxu0 0.0
  %599 = vmatpush1.msra.mxu0 0.0
  %600 = vmatprep.subr.mxu0 0.0
  %601 = vmatpush1.msra.mxu0 0.0
  %602 = vmatprep.subr.mxu0 0.0
  %603 = vmatpush1.msra.mxu0 0.0
  %604 = vmatprep.subr.mxu0 0.0
  %605 = vmatpush1.msra.mxu0 0.0
  %606 = vmatprep.subr.mxu0 0.0
  %607 = vmatpush1.msra.mxu0 0.0
  %608 = vmatprep.subr.mxu0 0.0
  %609 = vmatpush1.msra.mxu0 0.0
  %610 = vmatprep.subr.mxu0 0.0
  %611 = vmatpush1.msra.mxu0 0.0
  %612 = vmatprep.subr.mxu0 0.0
  %613 = vmatpush1.msra.mxu0 0.0
  %614 = vmatprep.subr.mxu0 0.0
  %615 = vmatpush1.msra.mxu0 0.0
  %616 = vmatprep.subr.mxu0 0.0
  %617 = vmatpush1.msra.mxu0 0.0
  %618 = vmatprep.mubr.f32.mxu0 0.0
  %619 = vmatmul.mubr.f32.gmra.mrb[0].mxu0 %v453
  %v620 = vpop.f32.mrb[0].mxu0
  %v621 = vadd.f32 %v449, %v620
  %v622 = vpop.f32.mrb[0].mxu0
  %623 = vmatprep.mubr.f32.mxu0 0.0
  %624 = vmatmul.mubr.f32.gmra.mrb[0].mxu0 %v456
  %v625 = vpop.f32.mrb[0].mxu0
  %v626 = vadd.f32 %v449, %v625
  %v627 = vpop.f32.mrb[0].mxu0
  %628 = vmatprep.mubr.f32.mxu0 0.0
  %629 = vmatmul.mubr.f32.gmra.mrb[0].mxu0 %v459
  %v630 = vpop.f32.mrb[0].mxu0
  %v631 = vadd.f32 %v449, %v630
  %v632 = vpop.f32.mrb[0].mxu0
  %633 = vmatprep.mubr.f32.mxu0 0.0
  %634 = vmatmul.mubr.f32.gmra.mrb[0].mxu0 %v462
  %v635 = vpop.f32.mrb[0].mxu0
  %v636 = vadd.f32 %v449, %v635
  %v637 = vpop.f32.mrb[0].mxu0
  %638 = vmatprep.mubr.f32.mxu0 0.0
  %639 = vmatmul.mubr.f32.gmra.mrb[0].mxu0 %v465
  %v640 = vpop.f32.mrb[0].mxu0
  %v641 = vadd.f32 %v449, %v640
  %v642 = vpop.f32.mrb[0].mxu0
  %643 = vmatprep.mubr.f32.mxu0 0.0
  %644 = vmatmul.mubr.f32.gmra.mrb[0].mxu0 %v468
  %v645 = vpop.f32.mrb[0].mxu0
  %v646 = vadd.f32 %v449, %v645
  %v647 = vpop.f32.mrb[0].mxu0
  %648 = vmatprep.mubr.f32.mxu0 0.0
  %649 = vmatmul.mubr.f32.gmra.mrb[0].mxu0 %v471
  %v650 = vpop.f32.mrb[0].mxu0
  %v651 = vadd.f32 %v449, %v650
  %v652 = vpop.f32.mrb[0].mxu0
  %653 = vmatprep.mubr.f32.mxu0 0.0
  %654 = vmatmul.mubr.f32.gmra.mrb[0].mxu0 %v474
  %v655 = vpop.f32.mrb[0].mxu0
  %v656 = vadd.f32 %v449, %v655
  %v657 = vpop.f32.mrb[0].mxu0
  %658 = vmatprep.mubr.f32.mxu0 0.0
  %659 = vmatmul.mubr.f32.gmra.mrb[0].mxu0 %v477
  %v660 = vpop.f32.mrb[0].mxu0
  %v661 = vadd.f32 %v449, %v660
  %v662 = vpop.f32.mrb[0].mxu0
  %663 = vmatprep.mubr.f32.mxu0 0.0
  %664 = vmatmul.mubr.f32.gmra.mrb[0].mxu0 %v480
  %v665 = vpop.f32.mrb[0].mxu0
  %v666 = vadd.f32 %v449, %v665
  %v667 = vpop.f32.mrb[0].mxu0
  %668 = vmatprep.mubr.f32.mxu0 0.0
  %669 = vmatmul.mubr.f32.gmra.mrb[0].mxu0 %v483
  %v670 = vpop.f32.mrb[0].mxu0
  %v671 = vadd.f32 %v449, %v670
  %v672 = vpop.f32.mrb[0].mxu0
  %673 = vmatprep.mubr.f32.mxu0 0.0
  %674 = vmatmul.mubr.f32.gmra.mrb[0].mxu0 %v486
  %v675 = vpop.f32.mrb[0].mxu0
  %v676 = vadd.f32 %v449, %v675
  %v677 = vpop.f32.mrb[0].mxu0
  %678 = vmatprep.mubr.f32.mxu0 0.0
  %679 = vmatmul.mubr.f32.gmra.mrb[0].mxu0 %v489
  %v680 = vpop.f32.mrb[0].mxu0
  %v681 = vadd.f32 %v449, %v680
  %v682 = vpop.f32.mrb[0].mxu0
  %683 = vmatprep.mubr.f32.mxu0 0.0
  %684 = vmatmul.mubr.f32.gmra.mrb[0].mxu0 %v492
  %v685 = vpop.f32.mrb[0].mxu0
  %v686 = vadd.f32 %v449, %v685
  %v687 = vpop.f32.mrb[0].mxu0
  %688 = vmatprep.mubr.f32.mxu0 0.0
  %689 = vmatmul.mubr.f32.gmra.mrb[0].mxu0 %v495
  %v690 = vpop.f32.mrb[0].mxu0
  %v691 = vadd.f32 %v449, %v690
  %v692 = vpop.f32.mrb[0].mxu0
  %693 = vmatprep.mubr.f32.mxu0 0.0
  %694 = vmatmul.mubr.f32.gmra.mrb[0].mxu0 %v498
  %v695 = vpop.f32.mrb[0].mxu0
  %v696 = vadd.f32 %v449, %v695
  %v697 = vpop.f32.mrb[0].mxu0
  %698 = vmatprep.mubr.f32.mxu0 0.0
  %699 = vmatmul.mubr.f32.gmra.mrb[0].mxu0 %v501
  %v700 = vpop.f32.mrb[0].mxu0
  %v701 = vadd.f32 %v449, %v700
  %v702 = vpop.f32.mrb[0].mxu0
  %703 = vmatprep.mubr.f32.mxu0 0.0
  %704 = vmatmul.mubr.f32.gmra.mrb[0].mxu0 %v504
  %v705 = vpop.f32.mrb[0].mxu0
  %v706 = vadd.f32 %v449, %v705
  %v707 = vpop.f32.mrb[0].mxu0
  %708 = vmatprep.mubr.f32.mxu0 0.0
  %709 = vmatmul.mubr.f32.gmra.mrb[0].mxu0 %v507
  %v710 = vpop.f32.mrb[0].mxu0
  %v711 = vadd.f32 %v449, %v710
  %v712 = vpop.f32.mrb[0].mxu0
  %713 = vmatprep.mubr.f32.mxu0 0.0
  %714 = vmatmul.mubr.f32.gmra.mrb[0].mxu0 %v510
  %v715 = vpop.f32.mrb[0].mxu0
  %v716 = vadd.f32 %v449, %v715
  %v717 = vpop.f32.mrb[0].mxu0
  %718 = vmatprep.mubr.f32.mxu0 0.0
  %719 = vmatmul.mubr.f32.gmra.mrb[0].mxu0 %v513
  %v720 = vpop.f32.mrb[0].mxu0
  %v721 = vadd.f32 %v449, %v720
  %v722 = vpop.f32.mrb[0].mxu0
  %723 = vmatprep.mubr.f32.mxu0 0.0
  %724 = vmatmul.mubr.f32.gmra.mrb[0].mxu0 %v516
  %v725 = vpop.f32.mrb[0].mxu0
  %v726 = vadd.f32 %v449, %v725
  %v727 = vpop.f32.mrb[0].mxu0
  %728 = vmatprep.mubr.f32.mxu0 0.0
  %729 = vmatmul.mubr.f32.gmra.mrb[0].mxu0 %v519
  %v730 = vpop.f32.mrb[0].mxu0
  %v731 = vadd.f32 %v449, %v730
  %v732 = vpop.f32.mrb[0].mxu0
  %733 = vmatprep.mubr.f32.mxu0 0.0
  %734 = vmatmul.mubr.f32.gmra.mrb[0].mxu0 %v522
  %v735 = vpop.f32.mrb[0].mxu0
  %v736 = vadd.f32 %v449, %v735
  %v737 = vpop.f32.mrb[0].mxu0
  %738 = vmatprep.mubr.f32.mxu0 0.0
  %739 = vmatmul.mubr.f32.gmra.mrb[0].mxu0 %v525
  %v740 = vpop.f32.mrb[0].mxu0
  %v741 = vadd.f32 %v449, %v740
  %v742 = vpop.f32.mrb[0].mxu0
  %743 = vmatprep.mubr.f32.mxu0 0.0
  %744 = vmatmul.mubr.f32.gmra.mrb[0].mxu0 %v528
  %v745 = vpop.f32.mrb[0].mxu0
  %v746 = vadd.f32 %v449, %v745
  %v747 = vpop.f32.mrb[0].mxu0
  %748 = vmatprep.mubr.f32.mxu0 0.0
  %749 = vmatmul.mubr.f32.gmra.mrb[0].mxu0 %v531
  %v750 = vpop.f32.mrb[0].mxu0
  %v751 = vadd.f32 %v449, %v750
  %v752 = vpop.f32.mrb[0].mxu0
  %753 = vmatprep.mubr.f32.mxu0 0.0
  %754 = vmatmul.mubr.f32.gmra.mrb[0].mxu0 %v534
  %v755 = vpop.f32.mrb[0].mxu0
  %v756 = vadd.f32 %v449, %v755
  %v757 = vpop.f32.mrb[0].mxu0
  %758 = vmatprep.mubr.f32.mxu0 0.0
  %759 = vmatmul.mubr.f32.gmra.mrb[0].mxu0 %v537
  %v760 = vpop.f32.mrb[0].mxu0
  %v761 = vadd.f32 %v449, %v760
  %v762 = vpop.f32.mrb[0].mxu0
  %763 = vmatprep.mubr.f32.mxu0 0.0
  %764 = vmatmul.mubr.f32.gmra.mrb[0].mxu0 %v540
  %v765 = vpop.f32.mrb[0].mxu0
  %v766 = vadd.f32 %v449, %v765
  %v767 = vpop.f32.mrb[0].mxu0
  %768 = vmatprep.mubr.f32.mxu0 0.0
  %769 = vmatmul.mubr.f32.gmra.mrb[0].mxu0 %v543
  %v770 = vpop.f32.mrb[0].mxu0
  %v771 = vadd.f32 %v449, %v770
  %v772 = vpop.f32.mrb[0].mxu0
  %773 = vmatprep.mubr.f32.mxu0 0.0
  %774 = vmatmul.mubr.f32.gmra.mrb[0].mxu0 %v546
  %v775 = vpop.f32.mrb[0].mxu0
  %v776 = vadd.f32 %v449, %v775
  %v777 = vpop.f32.mrb[0].mxu0
  %778 = vmatprep.mubr.f32.mxu0 0.0
  %779 = vmatmul.mubr.f32.gmra.mrb[0].mxu0 %v549
  %v780 = vpop.f32.mrb[0].mxu0
  %v781 = vadd.f32 %v449, %v780
  %v782 = vpop.f32.mrb[0].mxu0
  %783 = vmatprep.mubr.f32.mxu0 0.0
  %784 = vmatmul.mubr.f32.gmra.mrb[0].mxu0 %v552
  %v785 = vpop.f32.mrb[0].mxu0
  %v786 = vadd.f32 %v449, %v785
  %v787 = vpop.f32.mrb[0].mxu0
  %788 = vdwg.mxu0
  %vm789 = vcmask 31744
  %v790 = vsel %vm789, %v621, -inf
  %791 = vmax.xlane.f32.xlu0 %v790
  %v792 = vpop.xlane.xlu0 %791
  %v793 = vsel %vm789, %v626, -inf
  %794 = vmax.xlane.f32.xlu0 %v793
  %v795 = vpop.xlane.xlu0 %794
  %v796 = vsel %vm789, %v631, -inf
  %797 = vmax.xlane.f32.xlu0 %v796
  %v798 = vpop.xlane.xlu0 %797
  %v799 = vsel %vm789, %v636, -inf
  %800 = vmax.xlane.f32.xlu0 %v799
  %v801 = vpop.xlane.xlu0 %800
  %v802 = vsel %vm789, %v641, -inf
  %803 = vmax.xlane.f32.xlu0 %v802
  %v804 = vpop.xlane.xlu0 %803
  %v805 = vsel %vm789, %v646, -inf
  %806 = vmax.xlane.f32.xlu0 %v805
  %v807 = vpop.xlane.xlu0 %806
  %v808 = vsel %vm789, %v651, -inf
  %809 = vmax.xlane.f32.xlu0 %v808
  %v810 = vpop.xlane.xlu0 %809
  %v811 = vsel %vm789, %v656, -inf
  %812 = vmax.xlane.f32.xlu0 %v811
  %v813 = vpop.xlane.xlu0 %812
  %v814 = vsel %vm789, %v661, -inf
  %815 = vmax.xlane.f32.xlu0 %v814
  %v816 = vpop.xlane.xlu0 %815
  %v817 = vsel %vm789, %v666, -inf
  %818 = vmax.xlane.f32.xlu0 %v817
  %v819 = vpop.xlane.xlu0 %818
  %v820 = vsel %vm789, %v671, -inf
  %821 = vmax.xlane.f32.xlu0 %v820
  %v822 = vpop.xlane.xlu0 %821
  %v823 = vsel %vm789, %v676, -inf
  %824 = vmax.xlane.f32.xlu0 %v823
  %v825 = vpop.xlane.xlu0 %824
  %v826 = vsel %vm789, %v681, -inf
  %827 = vmax.xlane.f32.xlu0 %v826
  %v828 = vpop.xlane.xlu0 %827
  %v829 = vsel %vm789, %v686, -inf
  %830 = vmax.xlane.f32.xlu0 %v829
  %v831 = vpop.xlane.xlu0 %830
  %v832 = vsel %vm789, %v691, -inf
  %833 = vmax.xlane.f32.xlu0 %v832
  %v834 = vpop.xlane.xlu0 %833
  %v835 = vsel %vm789, %v696, -inf
  %836 = vmax.xlane.f32.xlu0 %v835
  %v837 = vpop.xlane.xlu0 %836
  %v838 = vsel %vm789, %v701, -inf
  %839 = vmax.xlane.f32.xlu0 %v838
  %v840 = vpop.xlane.xlu0 %839
  %v841 = vsel %vm789, %v706, -inf
  %842 = vmax.xlane.f32.xlu0 %v841
  %v843 = vpop.xlane.xlu0 %842
  %v844 = vsel %vm789, %v711, -inf
  %845 = vmax.xlane.f32.xlu0 %v844
  %v846 = vpop.xlane.xlu0 %845
  %v847 = vsel %vm789, %v716, -inf
  %848 = vmax.xlane.f32.xlu0 %v847
  %v849 = vpop.xlane.xlu0 %848
  %v850 = vsel %vm789, %v721, -inf
  %851 = vmax.xlane.f32.xlu0 %v850
  %v852 = vpop.xlane.xlu0 %851
  %v853 = vsel %vm789, %v726, -inf
  %854 = vmax.xlane.f32.xlu0 %v853
  %v855 = vpop.xlane.xlu0 %854
  %v856 = vsel %vm789, %v731, -inf
  %857 = vmax.xlane.f32.xlu0 %v856
  %v858 = vpop.xlane.xlu0 %857
  %v859 = vsel %vm789, %v736, -inf
  %860 = vmax.xlane.f32.xlu0 %v859
  %v861 = vpop.xlane.xlu0 %860
  %v862 = vsel %vm789, %v741, -inf
  %863 = vmax.xlane.f32.xlu0 %v862
  %v864 = vpop.xlane.xlu0 %863
  %v865 = vsel %vm789, %v746, -inf
  %866 = vmax.xlane.f32.xlu0 %v865
  %v867 = vpop.xlane.xlu0 %866
  %v868 = vsel %vm789, %v751, -inf
  %869 = vmax.xlane.f32.xlu0 %v868
  %v870 = vpop.xlane.xlu0 %869
  %v871 = vsel %vm789, %v756, -inf
  %872 = vmax.xlane.f32.xlu0 %v871
  %v873 = vpop.xlane.xlu0 %872
  %v874 = vsel %vm789, %v761, -inf
  %875 = vmax.xlane.f32.xlu0 %v874
  %v876 = vpop.xlane.xlu0 %875
  %v877 = vsel %vm789, %v766, -inf
  %878 = vmax.xlane.f32.xlu0 %v877
  %v879 = vpop.xlane.xlu0 %878
  %v880 = vsel %vm789, %v771, -inf
  %881 = vmax.xlane.f32.xlu0 %v880
  %v882 = vpop.xlane.xlu0 %881
  %v883 = vsel %vm789, %v776, -inf
  %884 = vmax.xlane.f32.xlu0 %v883
  %v885 = vpop.xlane.xlu0 %884
  %v886 = vsel %vm789, %v781, -inf
  %887 = vmax.xlane.f32.xlu0 %v886
  %v888 = vpop.xlane.xlu0 %887
  %v889 = vsel %vm789, %v786, -inf
  %890 = vmax.xlane.f32.xlu0 %v889
  %v891 = vpop.xlane.xlu0 %890
  %v892 = vsub.f32 %v621, %v792
  %v893 = vsub.f32 %v626, %v795
  %v894 = vsub.f32 %v631, %v798
  %v895 = vsub.f32 %v636, %v801
  %v896 = vsub.f32 %v641, %v804
  %v897 = vsub.f32 %v646, %v807
  %v898 = vsub.f32 %v651, %v810
  %v899 = vsub.f32 %v656, %v813
  %v900 = vsub.f32 %v661, %v816
  %v901 = vsub.f32 %v666, %v819
  %v902 = vsub.f32 %v671, %v822
  %v903 = vsub.f32 %v676, %v825
  %v904 = vsub.f32 %v681, %v828
  %v905 = vsub.f32 %v686, %v831
  %v906 = vsub.f32 %v691, %v834
  %v907 = vsub.f32 %v696, %v837
  %v908 = vsub.f32 %v701, %v840
  %v909 = vsub.f32 %v706, %v843
  %v910 = vsub.f32 %v711, %v846
  %v911 = vsub.f32 %v716, %v849
  %v912 = vsub.f32 %v721, %v852
  %v913 = vsub.f32 %v726, %v855
  %v914 = vsub.f32 %v731, %v858
  %v915 = vsub.f32 %v736, %v861
  %v916 = vsub.f32 %v741, %v864
  %v917 = vsub.f32 %v746, %v867
  %v918 = vsub.f32 %v751, %v870
  %v919 = vsub.f32 %v756, %v873
  %v920 = vsub.f32 %v761, %v876
  %v921 = vsub.f32 %v766, %v879
  %v922 = vsub.f32 %v771, %v882
  %v923 = vsub.f32 %v776, %v885
  %v924 = vsub.f32 %v781, %v888
  %v925 = vsub.f32 %v786, %v891
  %v926 = vmul.f32 %v892, 1.442695
  %v927 = vpow.pop %v926
  %v928 = vmul.f32 %v893, 1.442695
  %v929 = vpow.pop %v928
  %v930 = vmul.f32 %v894, 1.442695
  %v931 = vpow.pop %v930
  %v932 = vmul.f32 %v895, 1.442695
  %v933 = vpow.pop %v932
  %v934 = vmul.f32 %v896, 1.442695
  %v935 = vpow.pop %v934
  %v936 = vmul.f32 %v897, 1.442695
  %v937 = vpow.pop %v936
  %v938 = vmul.f32 %v898, 1.442695
  %v939 = vpow.pop %v938
  %v940 = vmul.f32 %v899, 1.442695
  %v941 = vpow.pop %v940
  %v942 = vmul.f32 %v900, 1.442695
  %v943 = vpow.pop %v942
  %v944 = vmul.f32 %v901, 1.442695
  %v945 = vpow.pop %v944
  %v946 = vmul.f32 %v902, 1.442695
  %v947 = vpow.pop %v946
  %v948 = vmul.f32 %v903, 1.442695
  %v949 = vpow.pop %v948
  %v950 = vmul.f32 %v904, 1.442695
  %v951 = vpow.pop %v950
  %v952 = vmul.f32 %v905, 1.442695
  %v953 = vpow.pop %v952
  %v954 = vmul.f32 %v906, 1.442695
  %v955 = vpow.pop %v954
  %v956 = vmul.f32 %v907, 1.442695
  %v957 = vpow.pop %v956
  %v958 = vmul.f32 %v908, 1.442695
  %v959 = vpow.pop %v958
  %v960 = vmul.f32 %v909, 1.442695
  %v961 = vpow.pop %v960
  %v962 = vmul.f32 %v910, 1.442695
  %v963 = vpow.pop %v962
  %v964 = vmul.f32 %v911, 1.442695
  %v965 = vpow.pop %v964
  %v966 = vmul.f32 %v912, 1.442695
  %v967 = vpow.pop %v966
  %v968 = vmul.f32 %v913, 1.442695
  %v969 = vpow.pop %v968
  %v970 = vmul.f32 %v914, 1.442695
  %v971 = vpow.pop %v970
  %v972 = vmul.f32 %v915, 1.442695
  %v973 = vpow.pop %v972
  %v974 = vmul.f32 %v916, 1.442695
  %v975 = vpow.pop %v974
  %v976 = vmul.f32 %v917, 1.442695
  %v977 = vpow.pop %v976
  %v978 = vmul.f32 %v918, 1.442695
  %v979 = vpow.pop %v978
  %v980 = vmul.f32 %v919, 1.442695
  %v981 = vpow.pop %v980
  %v982 = vmul.f32 %v920, 1.442695
  %v983 = vpow.pop %v982
  %v984 = vmul.f32 %v921, 1.442695
  %v985 = vpow.pop %v984
  %v986 = vmul.f32 %v922, 1.442695
  %v987 = vpow.pop %v986
  %v988 = vmul.f32 %v923, 1.442695
  %v989 = vpow.pop %v988
  %v990 = vmul.f32 %v924, 1.442695
  %v991 = vpow.pop %v990
  %v992 = vmul.f32 %v925, 1.442695
  %v993 = vpow.pop %v992
  %v994 = vsel %vm789, %v927, 0.0
  %995 = vadd.xlane.f32.xlu0 %v994
  %v996 = vpop.xlane.xlu0 %995
  %v997 = vsel %vm789, %v929, 0.0
  %998 = vadd.xlane.f32.xlu0 %v997
  %v999 = vpop.xlane.xlu0 %998
  %v1000 = vsel %vm789, %v931, 0.0
  %1001 = vadd.xlane.f32.xlu0 %v1000
  %v1002 = vpop.xlane.xlu0 %1001
  %v1003 = vsel %vm789, %v933, 0.0
  %1004 = vadd.xlane.f32.xlu0 %v1003
  %v1005 = vpop.xlane.xlu0 %1004
  %v1006 = vsel %vm789, %v935, 0.0
  %1007 = vadd.xlane.f32.xlu0 %v1006
  %v1008 = vpop.xlane.xlu0 %1007
  %v1009 = vsel %vm789, %v937, 0.0
  %1010 = vadd.xlane.f32.xlu0 %v1009
  %v1011 = vpop.xlane.xlu0 %1010
  %v1012 = vsel %vm789, %v939, 0.0
  %1013 = vadd.xlane.f32.xlu0 %v1012
  %v1014 = vpop.xlane.xlu0 %1013
  %v1015 = vsel %vm789, %v941, 0.0
  %1016 = vadd.xlane.f32.xlu0 %v1015
  %v1017 = vpop.xlane.xlu0 %1016
  %v1018 = vsel %vm789, %v943, 0.0
  %1019 = vadd.xlane.f32.xlu0 %v1018
  %v1020 = vpop.xlane.xlu0 %1019
  %v1021 = vsel %vm789, %v945, 0.0
  %1022 = vadd.xlane.f32.xlu0 %v1021
  %v1023 = vpop.xlane.xlu0 %1022
  %v1024 = vsel %vm789, %v947, 0.0
  %1025 = vadd.xlane.f32.xlu0 %v1024
  %v1026 = vpop.xlane.xlu0 %1025
  %v1027 = vsel %vm789, %v949, 0.0
  %1028 = vadd.xlane.f32.xlu0 %v1027
  %v1029 = vpop.xlane.xlu0 %1028
  %v1030 = vsel %vm789, %v951, 0.0
  %1031 = vadd.xlane.f32.xlu0 %v1030
  %v1032 = vpop.xlane.xlu0 %1031
  %v1033 = vsel %vm789, %v953, 0.0
  %1034 = vadd.xlane.f32.xlu0 %v1033
  %v1035 = vpop.xlane.xlu0 %1034
  %v1036 = vsel %vm789, %v955, 0.0
  %1037 = vadd.xlane.f32.xlu0 %v1036
  %v1038 = vpop.xlane.xlu0 %1037
  %v1039 = vsel %vm789, %v957, 0.0
  %1040 = vadd.xlane.f32.xlu0 %v1039
  %v1041 = vpop.xlane.xlu0 %1040
  %v1042 = vsel %vm789, %v959, 0.0
  %1043 = vadd.xlane.f32.xlu0 %v1042
  %v1044 = vpop.xlane.xlu0 %1043
  %v1045 = vsel %vm789, %v961, 0.0
  %1046 = vadd.xlane.f32.xlu0 %v1045
  %v1047 = vpop.xlane.xlu0 %1046
  %v1048 = vsel %vm789, %v963, 0.0
  %1049 = vadd.xlane.f32.xlu0 %v1048
  %v1050 = vpop.xlane.xlu0 %1049
  %v1051 = vsel %vm789, %v965, 0.0
  %1052 = vadd.xlane.f32.xlu0 %v1051
  %v1053 = vpop.xlane.xlu0 %1052
  %v1054 = vsel %vm789, %v967, 0.0
  %1055 = vadd.xlane.f32.xlu0 %v1054
  %v1056 = vpop.xlane.xlu0 %1055
  %v1057 = vsel %vm789, %v969, 0.0
  %1058 = vadd.xlane.f32.xlu0 %v1057
  %v1059 = vpop.xlane.xlu0 %1058
  %v1060 = vsel %vm789, %v971, 0.0
  %1061 = vadd.xlane.f32.xlu0 %v1060
  %v1062 = vpop.xlane.xlu0 %1061
  %v1063 = vsel %vm789, %v973, 0.0
  %1064 = vadd.xlane.f32.xlu0 %v1063
  %v1065 = vpop.xlane.xlu0 %1064
  %v1066 = vsel %vm789, %v975, 0.0
  %1067 = vadd.xlane.f32.xlu0 %v1066
  %v1068 = vpop.xlane.xlu0 %1067
  %v1069 = vsel %vm789, %v977, 0.0
  %1070 = vadd.xlane.f32.xlu0 %v1069
  %v1071 = vpop.xlane.xlu0 %1070
  %v1072 = vsel %vm789, %v979, 0.0
  %1073 = vadd.xlane.f32.xlu0 %v1072
  %v1074 = vpop.xlane.xlu0 %1073
  %v1075 = vsel %vm789, %v981, 0.0
  %1076 = vadd.xlane.f32.xlu0 %v1075
  %v1077 = vpop.xlane.xlu0 %1076
  %v1078 = vsel %vm789, %v983, 0.0
  %1079 = vadd.xlane.f32.xlu0 %v1078
  %v1080 = vpop.xlane.xlu0 %1079
  %v1081 = vsel %vm789, %v985, 0.0
  %1082 = vadd.xlane.f32.xlu0 %v1081
  %v1083 = vpop.xlane.xlu0 %1082
  %v1084 = vsel %vm789, %v987, 0.0
  %1085 = vadd.xlane.f32.xlu0 %v1084
  %v1086 = vpop.xlane.xlu0 %1085
  %v1087 = vsel %vm789, %v989, 0.0
  %1088 = vadd.xlane.f32.xlu0 %v1087
  %v1089 = vpop.xlane.xlu0 %1088
  %v1090 = vsel %vm789, %v991, 0.0
  %1091 = vadd.xlane.f32.xlu0 %v1090
  %v1092 = vpop.xlane.xlu0 %1091
  %v1093 = vsel %vm789, %v993, 0.0
  %1094 = vadd.xlane.f32.xlu0 %v1093
  %v1095 = vpop.xlane.xlu0 %1094
  %v1096 = vlog2.pop %v996
  %v1097 = vmul.f32 %v1096, 0.6931472
  %v1098 = vlog2.pop %v999
  %v1099 = vmul.f32 %v1098, 0.6931472
  %v1100 = vlog2.pop %v1002
  %v1101 = vmul.f32 %v1100, 0.6931472
  %v1102 = vlog2.pop %v1005
  %v1103 = vmul.f32 %v1102, 0.6931472
  %v1104 = vlog2.pop %v1008
  %v1105 = vmul.f32 %v1104, 0.6931472
  %v1106 = vlog2.pop %v1011
  %v1107 = vmul.f32 %v1106, 0.6931472
  %v1108 = vlog2.pop %v1014
  %v1109 = vmul.f32 %v1108, 0.6931472
  %v1110 = vlog2.pop %v1017
  %v1111 = vmul.f32 %v1110, 0.6931472
  %v1112 = vlog2.pop %v1020
  %v1113 = vmul.f32 %v1112, 0.6931472
  %v1114 = vlog2.pop %v1023
  %v1115 = vmul.f32 %v1114, 0.6931472
  %v1116 = vlog2.pop %v1026
  %v1117 = vmul.f32 %v1116, 0.6931472
  %v1118 = vlog2.pop %v1029
  %v1119 = vmul.f32 %v1118, 0.6931472
  %v1120 = vlog2.pop %v1032
  %v1121 = vmul.f32 %v1120, 0.6931472
  %v1122 = vlog2.pop %v1035
  %v1123 = vmul.f32 %v1122, 0.6931472
  %v1124 = vlog2.pop %v1038
  %v1125 = vmul.f32 %v1124, 0.6931472
  %v1126 = vlog2.pop %v1041
  %v1127 = vmul.f32 %v1126, 0.6931472
  %v1128 = vlog2.pop %v1044
  %v1129 = vmul.f32 %v1128, 0.6931472
  %v1130 = vlog2.pop %v1047
  %v1131 = vmul.f32 %v1130, 0.6931472
  %v1132 = vlog2.pop %v1050
  %v1133 = vmul.f32 %v1132, 0.6931472
  %v1134 = vlog2.pop %v1053
  %v1135 = vmul.f32 %v1134, 0.6931472
  %v1136 = vlog2.pop %v1056
  %v1137 = vmul.f32 %v1136, 0.6931472
  %v1138 = vlog2.pop %v1059
  %v1139 = vmul.f32 %v1138, 0.6931472
  %v1140 = vlog2.pop %v1062
  %v1141 = vmul.f32 %v1140, 0.6931472
  %v1142 = vlog2.pop %v1065
  %v1143 = vmul.f32 %v1142, 0.6931472
  %v1144 = vlog2.pop %v1068
  %v1145 = vmul.f32 %v1144, 0.6931472
  %v1146 = vlog2.pop %v1071
  %v1147 = vmul.f32 %v1146, 0.6931472
  %v1148 = vlog2.pop %v1074
  %v1149 = vmul.f32 %v1148, 0.6931472
  %v1150 = vlog2.pop %v1077
  %v1151 = vmul.f32 %v1150, 0.6931472
  %v1152 = vlog2.pop %v1080
  %v1153 = vmul.f32 %v1152, 0.6931472
  %v1154 = vlog2.pop %v1083
  %v1155 = vmul.f32 %v1154, 0.6931472
  %v1156 = vlog2.pop %v1086
  %v1157 = vmul.f32 %v1156, 0.6931472
  %v1158 = vlog2.pop %v1089
  %v1159 = vmul.f32 %v1158, 0.6931472
  %v1160 = vlog2.pop %v1092
  %v1161 = vmul.f32 %v1160, 0.6931472
  %v1162 = vlog2.pop %v1095
  %v1163 = vmul.f32 %v1162, 0.6931472
  %v1164 = vsub.f32 %v892, %v1097
  %v1165 = vsub.f32 %v893, %v1099
  %v1166 = vsub.f32 %v894, %v1101
  %v1167 = vsub.f32 %v895, %v1103
  %v1168 = vsub.f32 %v896, %v1105
  %v1169 = vsub.f32 %v897, %v1107
  %v1170 = vsub.f32 %v898, %v1109
  %v1171 = vsub.f32 %v899, %v1111
  %v1172 = vsub.f32 %v900, %v1113
  %v1173 = vsub.f32 %v901, %v1115
  %v1174 = vsub.f32 %v902, %v1117
  %v1175 = vsub.f32 %v903, %v1119
  %v1176 = vsub.f32 %v904, %v1121
  %v1177 = vsub.f32 %v905, %v1123
  %v1178 = vsub.f32 %v906, %v1125
  %v1179 = vsub.f32 %v907, %v1127
  %v1180 = vsub.f32 %v908, %v1129
  %v1181 = vsub.f32 %v909, %v1131
  %v1182 = vsub.f32 %v910, %v1133
  %v1183 = vsub.f32 %v911, %v1135
  %v1184 = vsub.f32 %v912, %v1137
  %v1185 = vsub.f32 %v913, %v1139
  %v1186 = vsub.f32 %v914, %v1141
  %v1187 = vsub.f32 %v915, %v1143
  %v1188 = vsub.f32 %v916, %v1145
  %v1189 = vsub.f32 %v917, %v1147
  %v1190 = vsub.f32 %v918, %v1149
  %v1191 = vsub.f32 %v919, %v1151
  %v1192 = vsub.f32 %v920, %v1153
  %v1193 = vsub.f32 %v921, %v1155
  %v1194 = vsub.f32 %v922, %v1157
  %v1195 = vsub.f32 %v923, %v1159
  %v1196 = vsub.f32 %v924, %v1161
  %v1197 = vsub.f32 %v925, %v1163
  %1198 = vst.msk [vmem:[%s5] sm:$0xff] %vm789, %v1164
  %1199 = vst.msk [vmem:[%s5 + $0x8] sm:$0xff] %vm789, %v1165
  %1200 = vst.msk [vmem:[%s5 + $0x10] sm:$0xff] %vm789, %v1166
  %1201 = vst.msk [vmem:[%s5 + $0x18] sm:$0xff] %vm789, %v1167
  %1202 = vst.msk [vmem:[%s5 + $0x20] sm:$0xff] %vm789, %v1168
  %1203 = vst.msk [vmem:[%s5 + $0x28] sm:$0xff] %vm789, %v1169
  %1204 = vst.msk [vmem:[%s5 + $0x30] sm:$0xff] %vm789, %v1170
  %1205 = vst.msk [vmem:[%s5 + $0x38] sm:$0xff] %vm789, %v1171
  %1206 = vst.msk [vmem:[%s5 + $0x40] sm:$0xff] %vm789, %v1172
  %1207 = vst.msk [vmem:[%s5 + $0x48] sm:$0xff] %vm789, %v1173
  %1208 = vst.msk [vmem:[%s5 + $0x50] sm:$0xff] %vm789, %v1174
  %1209 = vst.msk [vmem:[%s5 + $0x58] sm:$0xff] %vm789, %v1175
  %1210 = vst.msk [vmem:[%s5 + $0x60] sm:$0xff] %vm789, %v1176
  %1211 = vst.msk [vmem:[%s5 + $0x68] sm:$0xff] %vm789, %v1177
  %1212 = vst.msk [vmem:[%s5 + $0x70] sm:$0xff] %vm789, %v1178
  %1213 = vst.msk [vmem:[%s5 + $0x78] sm:$0xff] %vm789, %v1179
  %1214 = vst.msk [vmem:[%s5 + $0x80] sm:$0xff] %vm789, %v1180
  %1215 = vst.msk [vmem:[%s5 + $0x88] sm:$0xff] %vm789, %v1181
  %1216 = vst.msk [vmem:[%s5 + $0x90] sm:$0xff] %vm789, %v1182
  %1217 = vst.msk [vmem:[%s5 + $0x98] sm:$0xff] %vm789, %v1183
  %1218 = vst.msk [vmem:[%s5 + $0xa0] sm:$0xff] %vm789, %v1184
  %1219 = vst.msk [vmem:[%s5 + $0xa8] sm:$0xff] %vm789, %v1185
  %1220 = vst.msk [vmem:[%s5 + $0xb0] sm:$0xff] %vm789, %v1186
  %1221 = vst.msk [vmem:[%s5 + $0xb8] sm:$0xff] %vm789, %v1187
  %1222 = vst.msk [vmem:[%s5 + $0xc0] sm:$0xff] %vm789, %v1188
  %1223 = vst.msk [vmem:[%s5 + $0xc8] sm:$0xff] %vm789, %v1189
  %1224 = vst.msk [vmem:[%s5 + $0xd0] sm:$0xff] %vm789, %v1190
  %1225 = vst.msk [vmem:[%s5 + $0xd8] sm:$0xff] %vm789, %v1191
  %1226 = vst.msk [vmem:[%s5 + $0xe0] sm:$0xff] %vm789, %v1192
  %1227 = vst.msk [vmem:[%s5 + $0xe8] sm:$0xff] %vm789, %v1193
  %1228 = vst.msk [vmem:[%s5 + $0xf0] sm:$0xff] %vm789, %v1194
  %1229 = vst.msk [vmem:[%s5 + $0xf8] sm:$0xff] %vm789, %v1195
  %1230 = vst.msk [vmem:[%s5 + $0x100] sm:$0xff] %vm789, %v1196
  %1231 = vst.msk [vmem:[%s5 + $0x108] sm:$0xff] %vm789, %v1197
  // Predicated region
  $region22: #{dnn_forward.1} parent=0 // pred_check
    _
  $region23: #{dnn_forward.1} parent=0 // pred_check_branch
    %1233 = sbr.rel (0) target = $region25
  $region24: #{dnn_forward.1} parent=0 // pred_region
    _
  $region25: #{dnn_forward.1} parent=0 // pred_fallthru
    _
  // Predicated region
  $region26: #{dnn_forward.1} parent=0 // pred_check
    _
  $region27: #{dnn_forward.1} parent=0 // pred_check_branch
    %1235 = sbr.rel (0) target = $region29
  $region28: #{dnn_forward.1} parent=0 // pred_region
    _
  $region29: #{dnn_forward.1} parent=0 // pred_fallthru
    _

</llo_original>
